<compile_context>
chip_gen: v7x
topology: tpu7x:2x2x1
jax: 0.10.0
libtpu: 0.0.40
codegen_flags: <defaults>
</compile_context>

<pallas_src>
import functools

import jax
import jax.numpy as jnp
from jax.experimental import pallas as pl
from jax.experimental.pallas import tpu as pltpu

EPS = 1e-5  # nn.InstanceNorm3d default eps (affine=False, no running stats)


def _round_up(x, m):
    return ((x + m - 1) // m) * m


def _cdiv(a, b):
    return (a + b - 1) // b


def _divisor_tile(n, unit, cap):
    """Largest multiple of `unit` that divides `n` and is <= cap (>= unit)."""
    best = unit
    t = unit
    top = min(n, cap)
    while t <= top:
        if n % t == 0:
            best = t
        t += unit
    return best


@functools.lru_cache(maxsize=None)
def _vmem_budget_bytes():
    """~75% of per-core VMEM: ~48 MiB on v7x (64 MiB/TC), ~96 MiB on v5e/v6e."""
    try:
        cap = int(pltpu.get_tpu_info().vmem_capacity_bytes)
    except Exception:
        cap = 64 * 1024 * 1024
    if cap <= 0:
        cap = 64 * 1024 * 1024
    return (cap * 3) // 4


# ---------------------------------------------------------------------------
# Kernel 1: per-(n, c) instance-norm statistics, spatially tiled reduction.
#   grid = (row_tiles, spatial_tiles); spatial axis is 'arbitrary' (reduction).
# ---------------------------------------------------------------------------
def _stats_kernel(x_ref, mean_ref, rstd_ref, sum_ref, sq_ref, *, inv_count):
    j = pl.program_id(1)

    @pl.when(j == 0)
    def _():
        sum_ref[...] = jnp.zeros_like(sum_ref)
        sq_ref[...] = jnp.zeros_like(sq_ref)

    x = x_ref[...].astype(jnp.float32)
    sum_ref[...] += jnp.sum(x, axis=-1, keepdims=True)
    sq_ref[...] += jnp.sum(x * x, axis=-1, keepdims=True)

    @pl.when(j == pl.num_programs(1) - 1)
    def _():
        mean = sum_ref[...] * inv_count
        var = sq_ref[...] * inv_count - mean * mean          # biased variance
        mean_ref[...] = mean
        rstd_ref[...] = jax.lax.rsqrt(jnp.maximum(var, 0.0) + EPS)


def instance_norm_stats(x):
    """x: (N, C, D, H, W) -> (mean, rstd), each (N, C) float32."""
    N, C, D, H, W = x.shape
    S = D * H * W
    rows = N * C
    x2 = x.reshape(rows, S)                                   # free reshape

    budget = _vmem_budget_bytes()
    blk_target = min(budget // 4, 16 * 1024 * 1024)           # per input block

    # --- spatial tile (lane axis: multiple of 128, or the full row) ---
    if S * 8 * 4 <= blk_target:                                # full row fits
        ts, S_pad = S, S
    elif S % 128 == 0:
        cap = max(128, blk_target // (8 * 4) // 128 * 128)
        ts, S_pad = _divisor_tile(S, 128, cap), S
    else:                                                      # ragged S (rare)
        cap = max(128, blk_target // (8 * 4) // 128 * 128)
        n_s = _cdiv(S, cap)
        ts = _round_up(_cdiv(S, n_s), 128)
        S_pad = ts * n_s

    # --- row tile (sublane axis: multiple of 8, or the full rows dim) ---
    row_cap = max(8, blk_target // (ts * 4) // 8 * 8)
    if rows % 8 == 0:
        tr, rows_pad = _divisor_tile(rows, 8, row_cap), rows
    elif rows * ts * 4 <= 2 * blk_target:                      # small ragged rows
        tr, rows_pad = rows, rows
    else:                                                      # large ragged rows
        tr, rows_pad = 8, _round_up(rows, 8)

    if S_pad != S:
        x2 = jnp.pad(x2, ((0, 0), (0, S_pad - S)))             # zeros: sums unaffected
    if rows_pad != rows:
        x2 = jnp.pad(x2, ((0, rows_pad - rows), (0, 0)))

    kernel = functools.partial(_stats_kernel, inv_count=1.0 / float(S))
    mean, rstd = pl.pallas_call(
        kernel,
        out_shape=(
            jax.ShapeDtypeStruct((rows_pad, 1), jnp.float32),
            jax.ShapeDtypeStruct((rows_pad, 1), jnp.float32),
        ),
        grid=(rows_pad // tr, S_pad // ts),
        in_specs=[pl.BlockSpec((tr, ts), lambda i, j: (i, j))],
        out_specs=(
            pl.BlockSpec((tr, 1), lambda i, j: (i, 0)),
            pl.BlockSpec((tr, 1), lambda i, j: (i, 0)),
        ),
        scratch_shapes=[
            pltpu.VMEM((tr, 1), jnp.float32),
            pltpu.VMEM((tr, 1), jnp.float32),
        ],
        compiler_params=pltpu.CompilerParams(
            dimension_semantics=("parallel", "arbitrary"),
            vmem_limit_bytes=budget,
        ),
    )(x2)
    return mean[:rows, 0].reshape(N, C), rstd[:rows, 0].reshape(N, C)


# ---------------------------------------------------------------------------
# Kernel 2: weight-stationary conv-as-matmul with in-kernel normalization.
#   p_ref: (K, tm) raw patches, w_ref: (CP, K) shared weight,
#   scale/shift: (K, 1) per-sample rstd/mean, b_ref: (CP, 1) bias,
#   o_ref: (CP, tm) channel-major output block.
# ---------------------------------------------------------------------------
def _conv_kernel(p_ref, w_ref, scale_ref, shift_ref, b_ref, o_ref):
    p = p_ref[...].astype(jnp.float32)
    pn = (p - shift_ref[...]) * scale_ref[...]                 # instance norm
    acc = jnp.dot(w_ref[...], pn.astype(w_ref.dtype),
                  preferred_element_type=jnp.float32)          # (CP, tm)
    o_ref[...] = (acc + b_ref[...]).astype(o_ref.dtype)


def _space_to_depth_T(x, k):
    """kernel_size == stride, padding == 0: non-overlapping windows.
    Produces K-major patches (N, K, Mo) so the conv writes channel-major output.
    TODO(synk): fold this rearrangement into the conv kernel (needs Mosaic N-D
    VMEM transpose / strided lane gather support)."""
    N, C, D, H, W = x.shape
    Do, Ho, Wo = D // k, H // k, W // k
    xt = x.reshape(N, C, Do, k, Ho, k, Wo, k)
    xt = jnp.transpose(xt, (0, 1, 3, 5, 7, 2, 4, 6))           # (N,C,zd,zh,zw,Do,Ho,Wo)
    return xt.reshape(N, C * k ** 3, Do * Ho * Wo), (Do, Ho, Wo)


def _im2col_T(x, k, stride, padding):
    """General (overlapping / padded) fallback: K-major patches (N, K, Mo).
    TODO(synk): replace with in-kernel strided-DMA gather to avoid the k^3 HBM
    expansion."""
    N, C, D, H, W = x.shape
    s, p = stride, padding
    xp = jnp.pad(x, ((0, 0), (0, 0), (p, p), (p, p), (p, p)))
    Do = (D + 2 * p - k) // s + 1
    Ho = (H + 2 * p - k) // s + 1
    Wo = (W + 2 * p - k) // s + 1
    cols = []
    for zd in range(k):
        for zh in range(k):
            for zw in range(k):
                cols.append(
                    xp[:, :, zd:zd + s * Do:s, zh:zh + s * Ho:s, zw:zw + s * Wo:s])
    pt = jnp.stack(cols, axis=2)                               # (N, C, k^3, Do, Ho, Wo)
    return pt.reshape(N, C * k ** 3, Do * Ho * Wo), (Do, Ho, Wo)


@functools.partial(jax.jit, static_argnames=("stride", "padding", "use_bf16"))
def downsample_forward(x, weight, bias, *, stride, padding, use_bf16=True):
    """InstanceNorm3d (affine=False) followed by Conv3d."""
    N, C, D, H, W = x.shape
    Cout, Cin, kd, kh, kw = weight.shape
    if Cin != C or not (kd == kh == kw):
        raise ValueError("unexpected weight shape")
    k = kd
    K = C * k ** 3

    # --- (1) per-(n, c) instance-norm statistics (tiled Pallas reduction) ---
    mean, rstd = instance_norm_stats(x)                        # each (N, C) f32

    # --- (2) patches in K-major layout; normalization stays in the conv kernel ---
    non_overlap = (k == stride and padding == 0
                   and D % k == 0 and H % k == 0 and W % k == 0)
    if non_overlap:
        pmat, (Do, Ho, Wo) = _space_to_depth_T(x, k)           # raw x values
        scale = jnp.repeat(rstd, k ** 3, axis=1).reshape(N, K, 1)
        shift = jnp.repeat(mean, k ** 3, axis=1).reshape(N, K, 1)
    else:
        # Pre-normalize so conv zero-padding sees true zeros (matches PyTorch).
        xn = (x - mean[:, :, None, None, None]) * rstd[:, :, None, None, None]
        pmat, (Do, Ho, Wo) = _im2col_T(xn, k, stride, padding)
        scale = jnp.ones((N, K, 1), jnp.float32)
        shift = jnp.zeros((N, K, 1), jnp.float32)
    Mo = Do * Ho * Wo

    # --- (3) shared weight / bias, bf16 streaming dtype ---
    mm_dtype = jnp.bfloat16 if (use_bf16 and x.dtype == jnp.float32) else x.dtype
    pmat = pmat.astype(mm_dtype)                               # fuses into the copy
    CP = max(128, _round_up(Cout, 128))                        # lane-dense channels
    wmat = jnp.pad(weight.astype(jnp.float32).reshape(Cout, K),
                   ((0, CP - Cout), (0, 0))).astype(mm_dtype)  # (CP, K)
    bmat = jnp.pad(bias.astype(jnp.float32), (0, CP - Cout)).reshape(CP, 1)
    scale = scale.astype(jnp.float32)
    shift = shift.astype(jnp.float32)

    # --- (4) generation-aware, balanced M tiling (units of 128 lanes) ---
    budget = _vmem_budget_bytes()
    bp = jnp.dtype(mm_dtype).itemsize
    bo = jnp.dtype(x.dtype).itemsize
    fixed = 2 * (CP * K * bp + 2 * K * 4 + CP * 4)
    per_tm = 2 * (K * bp + CP * bo)                            # double-buffered in+out
    tm_cap = ((budget // 2 - fixed) // per_tm) // 128 * 128
    tm_cap = int(min(max(tm_cap, 128), 2048))
    m_units = _cdiv(Mo, 128)
    n_tiles = _cdiv(m_units, tm_cap // 128)
    if N == 1:
        n_tiles = max(n_tiles, min(2, m_units))                # feed both v7x cores
    tm = _cdiv(m_units, n_tiles) * 128
    Mo_pad = tm * n_tiles
    if Mo_pad != Mo:
        pmat = jnp.pad(pmat, ((0, 0), (0, 0), (0, Mo_pad - Mo)))

    out = pl.pallas_call(
        _conv_kernel,
        out_shape=jax.ShapeDtypeStruct((N, CP, Mo_pad), x.dtype),
        grid=(N, n_tiles),
        in_specs=[
            pl.BlockSpec((None, K, tm), lambda n, m: (n, 0, m)),   # patches (streamed)
            pl.BlockSpec((CP, K),       lambda n, m: (0, 0)),      # shared weight (resident)
            pl.BlockSpec((None, K, 1),  lambda n, m: (n, 0, 0)),   # per-sample rstd
            pl.BlockSpec((None, K, 1),  lambda n, m: (n, 0, 0)),   # per-sample mean
            pl.BlockSpec((CP, 1),       lambda n, m: (0, 0)),      # shared bias
        ],
        out_specs=pl.BlockSpec((None, CP, tm), lambda n, m: (n, 0, m)),
        compiler_params=pltpu.CompilerParams(
            dimension_semantics=("parallel", "parallel"),
            vmem_limit_bytes=budget,
        ),
    )(pmat, wmat, scale, shift, bmat)

    # Channel-major output -> NCDHW is a free reshape (no trailing transpose).
    return out[:, :Cout, :Mo].reshape(N, Cout, Do, Ho, Wo)


# ---------------------------------------------------------------------------
# Module wrapper (deterministic synthetic parameters, PyTorch-style init).
# ---------------------------------------------------------------------------
class Downsampling:
    def __init__(self, in_channels, out_channels, kernel_size,
                 stride=1, padding=0, key=None):
        if key is None:
            key = jax.random.PRNGKey(0)
        k = kernel_size
        fan_in = in_channels * k * k * k
        bound = 1.0 / (fan_in ** 0.5)
        kw_, kb_ = jax.random.split(key)
        self.weight = jax.random.uniform(
            kw_, (out_channels, in_channels, k, k, k), jnp.float32, -bound, bound)
        self.bias = jax.random.uniform(
            kb_, (out_channels,), jnp.float32, -bound, bound)
        self.stride = stride
        self.padding = padding

    def __call__(self, x, use_bf16=True):
        return downsample_forward(x, self.weight, self.bias,
                                  stride=self.stride, padding=self.padding,
                                  use_bf16=use_bf16)


# Pure-JAX reference for correctness checks.
def _reference(x, weight, bias, stride, padding):
    mean = jnp.mean(x, axis=(2, 3, 4), keepdims=True)
    var = jnp.mean(jnp.square(x - mean), axis=(2, 3, 4), keepdims=True)
    xn = (x - mean) * jax.lax.rsqrt(var + EPS)
    y = jax.lax.conv_general_dilated(
        xn, weight, window_strides=(stride,) * 3,
        padding=[(padding, padding)] * 3,
        dimension_numbers=("NCDHW", "OIDHW", "NCDHW"),
        precision=jax.lax.Precision.HIGHEST)
    return y + bias.reshape(1, -1, 1, 1, 1)


if __name__ == "__main__":
    key = jax.random.PRNGKey(0)
    kx, kp = jax.random.split(key)

    # small shapes: batch=2, in_channels=4, out_channels=8, spatial=8^3
    N, Cin, Cout, D = 2, 4, 8, 8
    x = jax.random.normal(kx, (N, Cin, D, D, D), jnp.float32)

    mod = Downsampling(Cin, Cout, kernel_size=2, stride=2, padding=0, key=kp)
    y_ref = _reference(x, mod.weight, mod.bias, mod.stride, mod.padding)

    # Exact f32 matmul path: tight tolerance.
    y32 = jax.block_until_ready(mod(x, use_bf16=False))
    assert y32.shape == (N, Cout, D // 2, D // 2, D // 2), y32.shape
    err32 = float(jnp.max(jnp.abs(y32 - y_ref)))
    assert jnp.allclose(y32, y_ref, atol=2e-4, rtol=2e-4), err32

    # Default fast path (bf16-streamed patches, f32 MXU accumulation): looser tol.
    y = jax.block_until_ready(mod(x))
    assert y.shape == (N, Cout, D // 2, D // 2, D // 2), y.shape
    err = float(jnp.max(jnp.abs(y - y_ref)))
    assert jnp.allclose(y, y_ref, atol=5e-2, rtol=5e-2), err

    print("KERNEL_OK")
</pallas_src>

<mosaic_0001>
module attributes {stable_mosaic.version = 11 : i64} {
  func.func @_stats_kernel(%arg0: i32, %arg1: i32, %arg2: memref<8x512xf32, #tpu.memory_space<vmem>>, %arg3: memref<8x1xf32, #tpu.memory_space<vmem>>, %arg4: memref<8x1xf32, #tpu.memory_space<vmem>>, %arg5: memref<8x1xf32, #tpu.memory_space<vmem>>, %arg6: memref<8x1xf32, #tpu.memory_space<vmem>>) attributes {dimension_semantics = [#tpu.dimension_semantics<parallel>, #tpu.dimension_semantics<arbitrary>], iteration_bounds = array<i64: 1, 1>, scalar_prefetch = 0 : i64, scratch_operands = 2 : i64, tpu.core_type = #tpu.core_type<tc>, window_params = [{transform_indices = @transform_0, window_bounds = array<i64: 8, 512>}, {transform_indices = @transform_1, window_bounds = array<i64: 8, 1>}, {transform_indices = @transform_2, window_bounds = array<i64: 8, 1>}]} {
    %c0_i32 = arith.constant 0 : i32
    %0 = arith.cmpi eq, %arg1, %c0_i32 : i32
    %1 = arith.extui %0 : i1 to i32
    %c0_i32_0 = arith.constant 0 : i32
    %2 = arith.cmpi ne, %1, %c0_i32_0 : i32
    scf.if %2 {
      %cst_13 = arith.constant 0.000000e+00 : f32
      %18 = vector.broadcast %cst_13 : f32 to vector<8x1xf32>
      %c0_14 = arith.constant 0 : index
      %c0_15 = arith.constant 0 : index
      %19 = vector.load %arg5[%c0_14, %c0_15] : memref<8x1xf32, #tpu.memory_space<vmem>>, vector<8x1xf32>
      tpu.vector_store %arg5[%c0_14, %c0_15], %18 {strides = array<i32>} : memref<8x1xf32, #tpu.memory_space<vmem>>, vector<8x1xf32>,
      %cst_16 = arith.constant 0.000000e+00 : f32
      %20 = vector.broadcast %cst_16 : f32 to vector<8x1xf32>
      %c0_17 = arith.constant 0 : index
      %c0_18 = arith.constant 0 : index
      %21 = vector.load %arg6[%c0_17, %c0_18] : memref<8x1xf32, #tpu.memory_space<vmem>>, vector<8x1xf32>
      tpu.vector_store %arg6[%c0_17, %c0_18], %20 {strides = array<i32>} : memref<8x1xf32, #tpu.memory_space<vmem>>, vector<8x1xf32>,
    } else {
    }
    %c0 = arith.constant 0 : index
    %c0_1 = arith.constant 0 : index
    %3 = vector.load %arg2[%c0, %c0_1] : memref<8x512xf32, #tpu.memory_space<vmem>>, vector<8x512xf32>
    %c0_2 = arith.constant 0 : index
    %c0_3 = arith.constant 0 : index
    %4 = vector.load %arg5[%c0_2, %c0_3] : memref<8x1xf32, #tpu.memory_space<vmem>>, vector<8x1xf32>
    %cst = arith.constant dense<0.000000e+00> : vector<8xf32>
    %5 = vector.multi_reduction <add>, %3, %cst [1] : vector<8x512xf32> to vector<8xf32>
    %6 = vector.shape_cast %5 : vector<8xf32> to vector<8x1xf32>
    %7 = arith.addf %4, %6 : vector<8x1xf32>
    %c0_4 = arith.constant 0 : index
    %c0_5 = arith.constant 0 : index
    %8 = vector.load %arg5[%c0_4, %c0_5] : memref<8x1xf32, #tpu.memory_space<vmem>>, vector<8x1xf32>
    tpu.vector_store %arg5[%c0_4, %c0_5], %7 {strides = array<i32>} : memref<8x1xf32, #tpu.memory_space<vmem>>, vector<8x1xf32>,
    %c0_6 = arith.constant 0 : index
    %c0_7 = arith.constant 0 : index
    %9 = vector.load %arg6[%c0_6, %c0_7] : memref<8x1xf32, #tpu.memory_space<vmem>>, vector<8x1xf32>
    %10 = arith.mulf %3, %3 : vector<8x512xf32>
    %cst_8 = arith.constant dense<0.000000e+00> : vector<8xf32>
    %11 = vector.multi_reduction <add>, %10, %cst_8 [1] : vector<8x512xf32> to vector<8xf32>
    %12 = vector.shape_cast %11 : vector<8xf32> to vector<8x1xf32>
    %13 = arith.addf %9, %12 : vector<8x1xf32>
    %c0_9 = arith.constant 0 : index
    %c0_10 = arith.constant 0 : index
    %14 = vector.load %arg6[%c0_9, %c0_10] : memref<8x1xf32, #tpu.memory_space<vmem>>, vector<8x1xf32>
    tpu.vector_store %arg6[%c0_9, %c0_10], %13 {strides = array<i32>} : memref<8x1xf32, #tpu.memory_space<vmem>>, vector<8x1xf32>,
    %c0_i32_11 = arith.constant 0 : i32
    %15 = arith.cmpi eq, %arg1, %c0_i32_11 : i32
    %16 = arith.extui %15 : i1 to i32
    %c0_i32_12 = arith.constant 0 : i32
    %17 = arith.cmpi ne, %16, %c0_i32_12 : i32
    scf.if %17 {
      %c0_13 = arith.constant 0 : index
      %c0_14 = arith.constant 0 : index
      %18 = vector.load %arg5[%c0_13, %c0_14] : memref<8x1xf32, #tpu.memory_space<vmem>>, vector<8x1xf32>
      %cst_15 = arith.constant 0.001953125 : f32
      %19 = vector.broadcast %cst_15 : f32 to vector<8x1xf32>
      %20 = arith.mulf %18, %19 : vector<8x1xf32>
      %c0_16 = arith.constant 0 : index
      %c0_17 = arith.constant 0 : index
      %21 = vector.load %arg6[%c0_16, %c0_17] : memref<8x1xf32, #tpu.memory_space<vmem>>, vector<8x1xf32>
      %cst_18 = arith.constant 0.001953125 : f32
      %22 = vector.broadcast %cst_18 : f32 to vector<8x1xf32>
      %23 = arith.mulf %21, %22 : vector<8x1xf32>
      %24 = arith.mulf %20, %20 : vector<8x1xf32>
      %25 = arith.subf %23, %24 : vector<8x1xf32>
      %c0_19 = arith.constant 0 : index
      %c0_20 = arith.constant 0 : index
      %26 = vector.load %arg3[%c0_19, %c0_20] : memref<8x1xf32, #tpu.memory_space<vmem>>, vector<8x1xf32>
      tpu.vector_store %arg3[%c0_19, %c0_20], %20 {strides = array<i32>} : memref<8x1xf32, #tpu.memory_space<vmem>>, vector<8x1xf32>,
      %cst_21 = arith.constant 0.000000e+00 : f32
      %27 = vector.broadcast %cst_21 : f32 to vector<8x1xf32>
      %28 = arith.maximumf %25, %27 : vector<8x1xf32>
      %cst_22 = arith.constant 9.99999974E-6 : f32
      %29 = vector.broadcast %cst_22 : f32 to vector<8x1xf32>
      %30 = arith.addf %28, %29 : vector<8x1xf32>
      %31 = math.rsqrt %30 : vector<8x1xf32>
      %c0_23 = arith.constant 0 : index
      %c0_24 = arith.constant 0 : index
      %32 = vector.load %arg4[%c0_23, %c0_24] : memref<8x1xf32, #tpu.memory_space<vmem>>, vector<8x1xf32>
      tpu.vector_store %arg4[%c0_23, %c0_24], %31 {strides = array<i32>} : memref<8x1xf32, #tpu.memory_space<vmem>>, vector<8x1xf32>,
    } else {
    }
    return
  }
  func.func @transform_0(%arg0: i32, %arg1: i32) -> (i32, i32) {
    %c0_i32 = arith.constant 0 : i32
    return %arg0, %arg1 : i32, i32
  }
  func.func @transform_1(%arg0: i32, %arg1: i32) -> (i32, i32) {
    %c0_i32 = arith.constant 0 : i32
    %c0_i32_0 = arith.constant 0 : i32
    return %arg0, %c0_i32 : i32, i32
  }
  func.func @transform_2(%arg0: i32, %arg1: i32) -> (i32, i32) {
    %c0_i32 = arith.constant 0 : i32
    %c0_i32_0 = arith.constant 0 : i32
    return %arg0, %c0_i32 : i32, i32
  }
}

module attributes {stable_mosaic.version = 11 : i64} {
  func.func @_conv_kernel(%arg0: i32, %arg1: i32, %arg2: memref<1x32x128xf32, #tpu.memory_space<vmem>>, %arg3: memref<128x32xf32, #tpu.memory_space<vmem>>, %arg4: memref<1x32x1xf32, #tpu.memory_space<vmem>>, %arg5: memref<1x32x1xf32, #tpu.memory_space<vmem>>, %arg6: memref<128x1xf32, #tpu.memory_space<vmem>>, %arg7: memref<1x128x128xf32, #tpu.memory_space<vmem>>) attributes {dimension_semantics = [#tpu.dimension_semantics<parallel>, #tpu.dimension_semantics<parallel>], iteration_bounds = array<i64: 2, 1>, scalar_prefetch = 0 : i64, scratch_operands = 0 : i64, tpu.core_type = #tpu.core_type<tc>, window_params = [{transform_indices = @transform_0, window_bounds = array<i64: 1, 32, 128>}, {pipeline_mode = #tpu.pipeline_mode<synchronous>, transform_indices = @transform_1, window_bounds = array<i64: 128, 32>}, {transform_indices = @transform_2, window_bounds = array<i64: 1, 32, 1>}, {transform_indices = @transform_3, window_bounds = array<i64: 1, 32, 1>}, {pipeline_mode = #tpu.pipeline_mode<synchronous>, transform_indices = @transform_4, window_bounds = array<i64: 128, 1>}, {transform_indices = @transform_5, window_bounds = array<i64: 1, 128, 128>}]} {
    %c0 = arith.constant 0 : index
    %c0_0 = arith.constant 0 : index
    %c0_1 = arith.constant 0 : index
    %0 = vector.load %arg2[%c0, %c0_0, %c0_1] : memref<1x32x128xf32, #tpu.memory_space<vmem>>, vector<1x32x128xf32>
    %1 = vector.shape_cast %0 : vector<1x32x128xf32> to vector<32x128xf32>
    %c0_2 = arith.constant 0 : index
    %c0_3 = arith.constant 0 : index
    %c0_4 = arith.constant 0 : index
    %2 = vector.load %arg5[%c0_2, %c0_3, %c0_4] : memref<1x32x1xf32, #tpu.memory_space<vmem>>, vector<1x32x1xf32>
    %3 = vector.shape_cast %2 : vector<1x32x1xf32> to vector<32x1xf32>
    %4 = vector.broadcast %3 : vector<32x1xf32> to vector<32x128xf32>
    %5 = arith.subf %1, %4 : vector<32x128xf32>
    %c0_5 = arith.constant 0 : index
    %c0_6 = arith.constant 0 : index
    %c0_7 = arith.constant 0 : index
    %6 = vector.load %arg4[%c0_5, %c0_6, %c0_7] : memref<1x32x1xf32, #tpu.memory_space<vmem>>, vector<1x32x1xf32>
    %7 = vector.shape_cast %6 : vector<1x32x1xf32> to vector<32x1xf32>
    %8 = vector.broadcast %7 : vector<32x1xf32> to vector<32x128xf32>
    %9 = arith.mulf %5, %8 : vector<32x128xf32>
    %c0_8 = arith.constant 0 : index
    %c0_9 = arith.constant 0 : index
    %10 = vector.load %arg3[%c0_8, %c0_9] : memref<128x32xf32, #tpu.memory_space<vmem>>, vector<128x32xf32>
    %cst = arith.constant dense<0.000000e+00> : vector<128x128xf32>
    %11 = tpu.matmul %10, %9, %cst {dimension_numbers = #tpu.dot_dimension_numbers<[1], [0], [0], [1], [0, 0, 1, 1], [], []>} : vector<128x32xf32>, vector<32x128xf32>, vector<128x128xf32> -> vector<128x128xf32>
    %c0_10 = arith.constant 0 : index
    %c0_11 = arith.constant 0 : index
    %12 = vector.load %arg6[%c0_10, %c0_11] : memref<128x1xf32, #tpu.memory_space<vmem>>, vector<128x1xf32>
    %13 = vector.broadcast %12 : vector<128x1xf32> to vector<128x128xf32>
    %14 = arith.addf %11, %13 : vector<128x128xf32>
    %c0_12 = arith.constant 0 : index
    %c0_13 = arith.constant 0 : index
    %c0_14 = arith.constant 0 : index
    %15 = vector.load %arg7[%c0_12, %c0_13, %c0_14] : memref<1x128x128xf32, #tpu.memory_space<vmem>>, vector<1x128x128xf32>
    %16 = vector.shape_cast %15 : vector<1x128x128xf32> to vector<128x128xf32>
    %17 = vector.shape_cast %14 : vector<128x128xf32> to vector<1x128x128xf32>
    tpu.vector_store %arg7[%c0_12, %c0_13, %c0_14], %17 {strides = array<i32>} : memref<1x128x128xf32, #tpu.memory_space<vmem>>, vector<1x128x128xf32>,
    return
  }
  func.func @transform_0(%arg0: i32, %arg1: i32) -> (i32, i32, i32) {
    %c0_i32 = arith.constant 0 : i32
    %c0_i32_0 = arith.constant 0 : i32
    return %arg0, %c0_i32, %arg1 : i32, i32, i32
  }
  func.func @transform_1(%arg0: i32, %arg1: i32) -> (i32, i32) {
    %c0_i32 = arith.constant 0 : i32
    %c0_i32_0 = arith.constant 0 : i32
    %c0_i32_1 = arith.constant 0 : i32
    return %c0_i32, %c0_i32_0 : i32, i32
  }
  func.func @transform_2(%arg0: i32, %arg1: i32) -> (i32, i32, i32) {
    %c0_i32 = arith.constant 0 : i32
    %c0_i32_0 = arith.constant 0 : i32
    %c0_i32_1 = arith.constant 0 : i32
    return %arg0, %c0_i32, %c0_i32_0 : i32, i32, i32
  }
  func.func @transform_3(%arg0: i32, %arg1: i32) -> (i32, i32, i32) {
    %c0_i32 = arith.constant 0 : i32
    %c0_i32_0 = arith.constant 0 : i32
    %c0_i32_1 = arith.constant 0 : i32
    return %arg0, %c0_i32, %c0_i32_0 : i32, i32, i32
  }
  func.func @transform_4(%arg0: i32, %arg1: i32) -> (i32, i32) {
    %c0_i32 = arith.constant 0 : i32
    %c0_i32_0 = arith.constant 0 : i32
    %c0_i32_1 = arith.constant 0 : i32
    return %c0_i32, %c0_i32_0 : i32, i32
  }
  func.func @transform_5(%arg0: i32, %arg1: i32) -> (i32, i32, i32) {
    %c0_i32 = arith.constant 0 : i32
    %c0_i32_0 = arith.constant 0 : i32
    return %arg0, %c0_i32, %arg1 : i32, i32, i32
  }
}

</mosaic_0001>

<llo_original>
// kernel: squeeze.3
$region0: #{squeeze.3}
  %s0 = inlined_call_operand.vmem [shape: f32[8], index: 0, kind: input, shape index: {}]
  %s1 = inlined_call_operand.vmem [shape: f32[2,4], index: 1, kind: output, shape index: {}]
  $region1: #{squeeze.3} parent=0
    #allocation0 [shape = 'u8[4096]{0}', space=vmem, size = 0x1000, scoped, tag = 'scoped mem for output reshape']
    #allocation1 [shape = 'u8[4096]{0}', space=vmem, size = 0x1000, scoped, tag = 'scoped mem for input reshape']
    %s3 = sshllo.u32 0, 1
    %v4 = vld [vmem:[%s0] sm:%s3]
    %5 = vst [vmem:[#allocation1] sm:%s3] %v4
    %v6 = vld [vmem:[#allocation1] sm:$0x1]
    %vm7 = vcmask 31744
    %8 = vst.msk [vmem:[#allocation0] sm:$0x1] %vm7, %v6
    %v9 = vld [vmem:[#allocation1] sm:$0x1]
    %10 = vrot.lane.b32.xlu0 %v9, 124
    %v11 = vpop.permute.xlu0 %10
    %vm12 = vcmask 31744
    %s13 = scalar_lea.vmem [#allocation0], 1
    %14 = vst.msk [vmem:[%s13] sm:$0x1] %vm12, %v11
    %s16 = sshllo.u32 0, 2
    %v18 = vld [vmem:[#allocation0] sm:%s16]
    %s19 = sshllo.u32 0, 2
    %20 = vst [vmem:[%s1] sm:%s19] %v18

// kernel: downsample_forward.2
$region0: #{downsample_forward.2}
  #allocation0 [shape = 'u32[]', space=smem, size = 0x4, offset = 0x4, fixed_abs, tag = 'smem constant byte address 0x4 - core index']
  #allocation1 [shape = 'u32[144,128]{1,0:T(1,128)}', space=vmem, size = 0x12000, scoped, tag = 'internal scratch']
  #allocation2 [shape = 'f32[8,1]{1,0:T(8,128)}', space=vmem, size = 0x1000, scoped, tag = 'scratch operand']
  #allocation3 [shape = 'f32[8,1]{1,0:T(8,128)}', space=vmem, size = 0x1000, scoped, tag = 'scratch operand']
  %s0 = inlined_call_operand.vmem [shape: f32[8,512], index: 0, kind: input, shape index: {}]
  %s1 = inlined_call_operand.vmem [shape: f32[8,1], index: 1, kind: output, shape index: {0}]
  %s2 = inlined_call_operand.vmem [shape: f32[8,1], index: 2, kind: output, shape index: {1}]
  %3 = xla_tuple %s1, %s2
  %s4 = sld [smem:[#allocation0]]
  $region30: #{downsample_forward.2} parent=0
    _
  %s6 = ssub.s32 1, %s4
  %s7 = scalar_select 0, %s6, %s4
  // Predicated region
  $region2: #{downsample_forward.2} parent=0 // pred_check
    _
  $region3: #{downsample_forward.2} parent=0 // pred_check_branch
    %9 = sbr.rel (0) target = $region5
  $region4: #{downsample_forward.2} parent=0 // pred_region
    _
  $region5: #{downsample_forward.2} parent=0 // pred_fallthru
    _
  %p10 = scmp.eq.s32.totalorder 0, 0
  // Predicated region
  $region6: #{downsample_forward.2} parent=0 // pred_check
    %p11 = pneg %p10
  $region7: #{downsample_forward.2} parent=0 // pred_check_branch
    %13 = sbr.rel (%p11) target = $region9
  $region8: #{downsample_forward.2} parent=0 // pred_region
    %vm14 = vcmask 7168
    %15 = vst.msk [vmem:[#allocation2] sm:$0xff] %vm14, 0.0
    %16 = vst.msk [vmem:[#allocation3] sm:$0xff] %vm14, 0.0
  $region9: #{downsample_forward.2} parent=0 // pred_fallthru
    _
  %v17 = vld [vmem:[%s0] sm:$0xff]
  %v18 = vld [vmem:[%s0 + $0x8] sm:$0xff]
  %v19 = vld [vmem:[%s0 + $0x10] sm:$0xff]
  %v20 = vld [vmem:[%s0 + $0x18] sm:$0xff]
  %v21 = vld [vmem:[#allocation2] sm:$0xff]
  %v22 = vadd.f32 %v17, %v18
  %v23 = vadd.f32 %v22, %v19
  %v24 = vadd.f32 %v23, %v20
  %25 = vadd.xlane.f32.xlu0 %v24
  %v26 = vpop.xlane.xlu0 %25
  %v27 = vadd.f32 %v21, %v26
  %vm28 = vcmask 7168
  %29 = vst.msk [vmem:[#allocation2] sm:$0xff] %vm28, %v27
  %v30 = vld [vmem:[#allocation3] sm:$0xff]
  %v31 = vmul.f32 %v17, %v17
  %v32 = vmul.f32 %v18, %v18
  %v33 = vmul.f32 %v19, %v19
  %v34 = vmul.f32 %v20, %v20
  %v35 = vadd.f32 %v31, %v32
  %v36 = vadd.f32 %v35, %v33
  %v37 = vadd.f32 %v36, %v34
  %38 = vadd.xlane.f32.xlu0 %v37
  %v39 = vpop.xlane.xlu0 %38
  %v40 = vadd.f32 %v30, %v39
  %41 = vst.msk [vmem:[#allocation3] sm:$0xff] %vm28, %v40
  // Predicated region
  $region10: #{downsample_forward.2} parent=0 // pred_check
    %p42 = pneg %p10
  $region11: #{downsample_forward.2} parent=0 // pred_check_branch
    %44 = sbr.rel (%p42) target = $region13
  $region12: #{downsample_forward.2} parent=0 // pred_region
    %v45 = vld [vmem:[#allocation2] sm:$0xff]
    %v46 = vmul.f32 %v45, 0.001953125
    %v47 = vld [vmem:[#allocation3] sm:$0xff]
    %v48 = vmul.f32 %v47, 0.001953125
    %v49 = vmul.f32 %v46, %v46
    %v50 = vsub.f32 %v48, %v49
    %51 = vst.msk [vmem:[%s1] sm:$0xff] %vm28, %v46
    %v52 = vmax.f32 %v50, 0.0
    %v53 = vadd.f32 %v52, 1e-05
    %v54 = vrsqrt.pop %v53
    %55 = vst.msk [vmem:[%s2] sm:$0xff] %vm28, %v54
  $region13: #{downsample_forward.2} parent=0 // pred_fallthru
    _
  // Predicated region
  $region14: #{downsample_forward.2} parent=0 // pred_check
    _
  $region15: #{downsample_forward.2} parent=0 // pred_check_branch
    %57 = sbr.rel (0) target = $region17
  $region16: #{downsample_forward.2} parent=0 // pred_region
    _
  $region17: #{downsample_forward.2} parent=0 // pred_fallthru
    _
  // Predicated region
  $region18: #{downsample_forward.2} parent=0 // pred_check
    _
  $region19: #{downsample_forward.2} parent=0 // pred_check_branch
    %59 = sbr.rel (0) target = $region21
  $region20: #{downsample_forward.2} parent=0 // pred_region
    _
  $region21: #{downsample_forward.2} parent=0 // pred_fallthru
    _
  // Predicated region
  $region22: #{downsample_forward.2} parent=0 // pred_check
    _
  $region23: #{downsample_forward.2} parent=0 // pred_check_branch
    %61 = sbr.rel (0) target = $region25
  $region24: #{downsample_forward.2} parent=0 // pred_region
    _
  $region25: #{downsample_forward.2} parent=0 // pred_fallthru
    _
  // Predicated region
  $region26: #{downsample_forward.2} parent=0 // pred_check
    _
  $region27: #{downsample_forward.2} parent=0 // pred_check_branch
    %63 = sbr.rel (0) target = $region29
  $region28: #{downsample_forward.2} parent=0 // pred_region
    _
  $region29: #{downsample_forward.2} parent=0 // pred_fallthru
    _

// kernel: downsample_forward.3
$region0: #{downsample_forward.3}
  #allocation0 [shape = 'u32[]', space=smem, size = 0x4, offset = 0x4, fixed_abs, tag = 'smem constant byte address 0x4 - core index']
  #allocation1 [shape = 'u32[144,128]{1,0:T(1,128)}', space=vmem, size = 0x12000, scoped, tag = 'internal scratch']
  %s0 = inlined_call_operand.vmem [shape: f32[2,32,128], index: 0, kind: input, shape index: {}]
  %s1 = inlined_call_operand.vmem [shape: f32[128,32], index: 1, kind: input, shape index: {}]
  %s2 = inlined_call_operand.vmem [shape: f32[2,32,1], index: 2, kind: input, shape index: {}]
  %s3 = inlined_call_operand.vmem [shape: f32[2,32,1], index: 3, kind: input, shape index: {}]
  %s4 = inlined_call_operand.vmem [shape: f32[128,1], index: 4, kind: input, shape index: {}]
  %s5 = inlined_call_operand.vmem [shape: f32[2,128,128], index: 5, kind: output, shape index: {}]
  %s6 = sld [smem:[#allocation0]]
  $region53: #{downsample_forward.3} parent=0
    _
  %s8 = ssub.s32 1, %s6
  %s9 = scalar_select 0, %s8, %s6
  loop: start=0, step=1, limit=4
  $region2: #{downsample_forward.3} parent=0 // loop_pre_header
    _
  $region3: #{downsample_forward.3} parent=0 // loop_header
    %s11 = sphi 0, %s15
    %p12 = scmp.ge.s32.totalorder %s11, 4
    %s18 = sphi 0, %s30
    %s19 = sphi 0, %s26
    %s20 = sphi 0, %s18
    %s21 = sphi 0, %s19
    %s22 = sphi 0, %s20
    %s23 = sphi 0, %s21
    %s35 = sphi 0, %s37
    %s38 = sphi 0, %s35
    %s39 = sphi 0, %s38
    %s55 = sphi 0, %s39
    %s59 = sphi 0, %s59
    %s61 = sphi 0, %s59
    %s62 = sphi 0, %s61
    %s76 = sphi 0, %s62
    %s82 = sphi 0, %s84
    %s85 = sphi 0, %s82
    %s86 = sphi 0, %s85
    %s102 = sphi 0, %s86
    %s108 = sphi 0, %s110
    %s111 = sphi 0, %s108
    %s112 = sphi 0, %s111
    %s128 = sphi 0, %s112
    %s132 = sphi 0, %s132
    %s134 = sphi 0, %s132
    %s135 = sphi 0, %s134
    %s149 = sphi 0, %s135
    %s157 = sphi 0, %s159
    %s160 = sphi 0, %s157
    %s161 = sphi 0, %s160
    %s177 = sphi 0, %s161
  $region4: #{downsample_forward.3} parent=0 // loop_header_branch
    %14 = sbr.rel (%p12) target = $region8
  $region5: #{downsample_forward.3} parent=0 // loop_body
    %s16 = ssub.s32 %s11, 1
    %s17 = ssub.s32 %s11, 2
    %s24 = sadd.s32 1, %s19
    %p25 = scmp.ge.s32.totalorder %s24, 1
    %s26 = scalar_select %p25, 0, %s24
    %s27 = sadd.s32 1, %s18
    %s28 = scalar_select %p25, %s27, %s18
    %p29 = scmp.ge.s32.totalorder %s28, 2
    %s30 = scalar_select %p29, 0, %s28
    %s31 = ssub.s32 %s18, %s30
    %s32 = ssub.s32 %s19, %s26
    %s33 = sor.u32 %s31, %s32
    %p34 = scmp.eq.s32.totalorder %s33, 0
    %s36 = sadd.s32 %s35, 1
    %s37 = scalar_select %p34, %s35, %s36
    %p40 = pneg %p34
    %p41 = scmp.eq.s32.totalorder %s11, 1
    %p42 = por %p40, %p41
    %p43 = scmp.ne.s32.totalorder %s35, %s38
    %p44 = scmp.eq.s32.totalorder %s11, 0
    %p45 = por %p43, %p44
    %p46 = scmp.ne.s32.totalorder %s35, %s38
    %p47 = scmp.eq.s32.totalorder %s16, 1
    %p48 = por %p46, %p47
    %p49 = scmp.ne.s32.totalorder %s38, %s39
    %p50 = scmp.eq.s32.totalorder %s16, 0
    %p51 = por %p49, %p50
    %p52 = scmp.ne.s32.totalorder %s38, %s39
    %p53 = scmp.eq.s32.totalorder %s17, 1
    %p54 = por %p52, %p53
    %p56 = scmp.ne.s32.totalorder %s39, %s55
    %p57 = scmp.eq.s32.totalorder %s17, 0
    %p58 = por %p56, %p57
    %s60 = sadd.s32 %s59, 1
    %p63 = scmp.eq.s32.totalorder %s11, 1
    %p64 = scmp.ne.s32.totalorder %s59, %s61
    %p65 = scmp.eq.s32.totalorder %s11, 0
    %p66 = por %p64, %p65
    %p67 = scmp.ne.s32.totalorder %s59, %s61
    %p68 = scmp.eq.s32.totalorder %s16, 1
    %p69 = por %p67, %p68
    %p70 = scmp.ne.s32.totalorder %s61, %s62
    %p71 = scmp.eq.s32.totalorder %s16, 0
    %p72 = por %p70, %p71
    %p73 = scmp.ne.s32.totalorder %s61, %s62
    %p74 = scmp.eq.s32.totalorder %s17, 1
    %p75 = por %p73, %p74
    %p77 = scmp.ne.s32.totalorder %s62, %s76
    %p78 = scmp.eq.s32.totalorder %s17, 0
    %p79 = por %p77, %p78
    %s80 = ssub.s32 %s18, %s30
    %p81 = scmp.eq.s32.totalorder %s80, 0
    %s83 = sadd.s32 %s82, 1
    %s84 = scalar_select %p81, %s82, %s83
    %p87 = pneg %p81
    %p88 = scmp.eq.s32.totalorder %s11, 1
    %p89 = por %p87, %p88
    %p90 = scmp.ne.s32.totalorder %s82, %s85
    %p91 = scmp.eq.s32.totalorder %s11, 0
    %p92 = por %p90, %p91
    %p93 = scmp.ne.s32.totalorder %s82, %s85
    %p94 = scmp.eq.s32.totalorder %s16, 1
    %p95 = por %p93, %p94
    %p96 = scmp.ne.s32.totalorder %s85, %s86
    %p97 = scmp.eq.s32.totalorder %s16, 0
    %p98 = por %p96, %p97
    %p99 = scmp.ne.s32.totalorder %s85, %s86
    %p100 = scmp.eq.s32.totalorder %s17, 1
    %p101 = por %p99, %p100
    %p103 = scmp.ne.s32.totalorder %s86, %s102
    %p104 = scmp.eq.s32.totalorder %s17, 0
    %p105 = por %p103, %p104
    %s106 = ssub.s32 %s18, %s30
    %p107 = scmp.eq.s32.totalorder %s106, 0
    %s109 = sadd.s32 %s108, 1
    %s110 = scalar_select %p107, %s108, %s109
    %p113 = pneg %p107
    %p114 = scmp.eq.s32.totalorder %s11, 1
    %p115 = por %p113, %p114
    %p116 = scmp.ne.s32.totalorder %s108, %s111
    %p117 = scmp.eq.s32.totalorder %s11, 0
    %p118 = por %p116, %p117
    %p119 = scmp.ne.s32.totalorder %s108, %s111
    %p120 = scmp.eq.s32.totalorder %s16, 1
    %p121 = por %p119, %p120
    %p122 = scmp.ne.s32.totalorder %s111, %s112
    %p123 = scmp.eq.s32.totalorder %s16, 0
    %p124 = por %p122, %p123
    %p125 = scmp.ne.s32.totalorder %s111, %s112
    %p126 = scmp.eq.s32.totalorder %s17, 1
    %p127 = por %p125, %p126
    %p129 = scmp.ne.s32.totalorder %s112, %s128
    %p130 = scmp.eq.s32.totalorder %s17, 0
    %p131 = por %p129, %p130
    %s133 = sadd.s32 %s132, 1
    %p136 = scmp.eq.s32.totalorder %s11, 1
    %p137 = scmp.ne.s32.totalorder %s132, %s134
    %p138 = scmp.eq.s32.totalorder %s11, 0
    %p139 = por %p137, %p138
    %p140 = scmp.ne.s32.totalorder %s132, %s134
    %p141 = scmp.eq.s32.totalorder %s16, 1
    %p142 = por %p140, %p141
    %p143 = scmp.ne.s32.totalorder %s134, %s135
    %p144 = scmp.eq.s32.totalorder %s16, 0
    %p145 = por %p143, %p144
    %p146 = scmp.ne.s32.totalorder %s134, %s135
    %p147 = scmp.eq.s32.totalorder %s17, 1
    %p148 = por %p146, %p147
    %p150 = scmp.ne.s32.totalorder %s135, %s149
    %p151 = scmp.eq.s32.totalorder %s17, 0
    %p152 = por %p150, %p151
    %s153 = ssub.s32 %s18, %s30
    %s154 = ssub.s32 %s19, %s26
    %s155 = sor.u32 %s153, %s154
    %p156 = scmp.eq.s32.totalorder %s155, 0
    %s158 = sadd.s32 %s157, 1
    %s159 = scalar_select %p156, %s157, %s158
    %p162 = pneg %p156
    %p163 = scmp.eq.s32.totalorder %s11, 1
    %p164 = por %p162, %p163
    %p165 = scmp.ne.s32.totalorder %s157, %s160
    %p166 = scmp.eq.s32.totalorder %s11, 0
    %p167 = por %p165, %p166
    %p168 = scmp.ne.s32.totalorder %s157, %s160
    %p169 = scmp.eq.s32.totalorder %s16, 1
    %p170 = por %p168, %p169
    %p171 = scmp.ne.s32.totalorder %s160, %s161
    %p172 = scmp.eq.s32.totalorder %s16, 0
    %p173 = por %p171, %p172
    %p174 = scmp.ne.s32.totalorder %s160, %s161
    %p175 = scmp.eq.s32.totalorder %s17, 1
    %p176 = por %p174, %p175
    %p178 = scmp.ne.s32.totalorder %s161, %s177
    %p179 = scmp.eq.s32.totalorder %s17, 0
    %p180 = por %p178, %p179
    %p181 = scmp.le.s32.totalorder 1, %s11
    %p182 = scmp.lt.s32.totalorder %s11, 3
    %p183 = pnand %p181, %p182
    %p184 = pneg %p183
    // Predicated region
    $region9: #{downsample_forward.3} parent=5 // pred_check
      _
    $region10: #{downsample_forward.3} parent=5 // pred_check_branch
      %186 = sbr.rel (%p183) target = $region12
    $region11: #{downsample_forward.3} parent=5 // pred_region
      %s187 = ssub.s32 %s11, 1
      // Predicated region
      $region13: #{downsample_forward.3} parent=11 // pred_check
        %p188 = pneg %p72
      $region14: #{downsample_forward.3} parent=11 // pred_check_branch
        %190 = sbr.rel (%p188) target = $region16
      $region15: #{downsample_forward.3} parent=11 // pred_region
        _
      $region16: #{downsample_forward.3} parent=11 // pred_fallthru
        _
      // Predicated region
      $region17: #{downsample_forward.3} parent=11 // pred_check
        %p191 = pneg %p145
      $region18: #{downsample_forward.3} parent=11 // pred_check_branch
        %193 = sbr.rel (%p191) target = $region20
      $region19: #{downsample_forward.3} parent=11 // pred_region
        _
      $region20: #{downsample_forward.3} parent=11 // pred_fallthru
        _
    $region12: #{downsample_forward.3} parent=5 // pred_fallthru
      _
    %p194 = scmp.lt.s32.totalorder %s11, 2
    // Predicated region
    $region21: #{downsample_forward.3} parent=5 // pred_check
      %p195 = pneg %p194
    $region22: #{downsample_forward.3} parent=5 // pred_check_branch
      %197 = sbr.rel (%p195) target = $region24
    $region23: #{downsample_forward.3} parent=5 // pred_region
      // Predicated region
      $region25: #{downsample_forward.3} parent=23 // pred_check
        %p198 = pneg %p45
      $region26: #{downsample_forward.3} parent=23 // pred_check_branch
        %200 = sbr.rel (%p198) target = $region28
      $region27: #{downsample_forward.3} parent=23 // pred_region
        %p201 = scmp.lt.s32.totalorder %s18, 1
        %s202 = scalar_select %p201, %s18, 1
        %p203 = scmp.lt.s32.totalorder %s19, 0
        %s204 = scalar_select %p203, %s19, 0
        %s205 = smul.addr %s202, 4
        %s206 = sadd.s32 %s204, %s205
        %s207 = smul.addr %s206, 8
        %s208 = scalar_lea.vmem %s0, %s207
      $region28: #{downsample_forward.3} parent=23 // pred_fallthru
        _
      // Predicated region
      $region29: #{downsample_forward.3} parent=23 // pred_check
        %p209 = pneg %p92
      $region30: #{downsample_forward.3} parent=23 // pred_check_branch
        %211 = sbr.rel (%p209) target = $region32
      $region31: #{downsample_forward.3} parent=23 // pred_region
        %p212 = scmp.lt.s32.totalorder %s18, 1
        %s213 = scalar_select %p212, %s18, 1
        %s214 = smul.addr %s213, 4
        %s215 = smul.addr %s214, 8
        %s216 = scalar_lea.vmem %s2, %s215
      $region32: #{downsample_forward.3} parent=23 // pred_fallthru
        _
      // Predicated region
      $region33: #{downsample_forward.3} parent=23 // pred_check
        %p217 = pneg %p118
      $region34: #{downsample_forward.3} parent=23 // pred_check_branch
        %219 = sbr.rel (%p217) target = $region36
      $region35: #{downsample_forward.3} parent=23 // pred_region
        %p220 = scmp.lt.s32.totalorder %s18, 1
        %s221 = scalar_select %p220, %s18, 1
        %s222 = smul.addr %s221, 4
        %s223 = smul.addr %s222, 8
        %s224 = scalar_lea.vmem %s3, %s223
      $region36: #{downsample_forward.3} parent=23 // pred_fallthru
        _
    $region24: #{downsample_forward.3} parent=5 // pred_fallthru
      _
    %p225 = scmp.le.s32.totalorder 1, %s11
    %p226 = scmp.lt.s32.totalorder %s11, 3
    %p227 = pnand %p225, %p226
    %p228 = pneg %p227
    // Predicated region
    $region37: #{downsample_forward.3} parent=5 // pred_check
      _
    $region38: #{downsample_forward.3} parent=5 // pred_check_branch
      %230 = sbr.rel (%p227) target = $region40
    $region39: #{downsample_forward.3} parent=5 // pred_region
      %s231 = ssub.s32 %s11, 1
      %p232 = scmp.lt.s32.totalorder %s20, 1
      %s233 = scalar_select %p232, %s20, 1
      %p234 = scmp.lt.s32.totalorder %s21, 0
      %s235 = scalar_select %p234, %s21, 0
      %s236 = smul.addr %s233, 4
      %s237 = sadd.s32 %s235, %s236
      %s238 = smul.addr %s237, 8
      %s239 = scalar_lea.vmem %s0, %s238
      %p240 = pneg %p51
      %p241 = pneg %p48
      %p242 = pneg %p72
      %p243 = pneg %p69
      %p244 = scmp.lt.s32.totalorder %s20, 1
      %s245 = scalar_select %p244, %s20, 1
      %s246 = smul.addr %s245, 4
      %s247 = smul.addr %s246, 8
      %s248 = scalar_lea.vmem %s2, %s247
      %p249 = pneg %p98
      %p250 = pneg %p95
      %p251 = scmp.lt.s32.totalorder %s20, 1
      %s252 = scalar_select %p251, %s20, 1
      %s253 = smul.addr %s252, 4
      %s254 = smul.addr %s253, 8
      %s255 = scalar_lea.vmem %s3, %s254
      %p256 = pneg %p124
      %p257 = pneg %p121
      %p258 = pneg %p145
      %p259 = pneg %p142
      %p260 = pneg %p173
      %p261 = pneg %p170
      %p262 = scmp.lt.s32.totalorder %s20, 1
      %s263 = scalar_select %p262, %s20, 1
      %p264 = scmp.lt.s32.totalorder %s21, 0
      %s265 = scalar_select %p264, %s21, 0
      %s266 = smul.addr %s263, 16
      %s267 = sadd.s32 %s265, %s266
      %s268 = smul.addr %s267, 8
      %s269 = scalar_lea.vmem %s5, %s268
      %p270 = scmp.lt.s32.totalorder %s20, 1
      %s271 = scalar_select %p270, %s20, 1
      %p272 = scmp.lt.s32.totalorder %s21, 0
      %s273 = scalar_select %p272, %s21, 0
      %s274 = smul.addr %s271, 4
      %s275 = sadd.s32 %s273, %s274
      %s276 = smul.addr %s275, 8
      %s277 = scalar_lea.vmem %s0, %s276
      %p278 = scmp.lt.s32.totalorder %s20, 1
      %s279 = scalar_select %p278, %s20, 1
      %s280 = smul.addr %s279, 4
      %s281 = smul.addr %s280, 8
      %s282 = scalar_lea.vmem %s2, %s281
      %p283 = scmp.lt.s32.totalorder %s20, 1
      %s284 = scalar_select %p283, %s20, 1
      %s285 = smul.addr %s284, 4
      %s286 = smul.addr %s285, 8
      %s287 = scalar_lea.vmem %s3, %s286
      %p288 = scmp.lt.s32.totalorder %s20, 1
      %s289 = scalar_select %p288, %s20, 1
      %p290 = scmp.lt.s32.totalorder %s21, 0
      %s291 = scalar_select %p290, %s21, 0
      %s292 = smul.addr %s289, 16
      %s293 = sadd.s32 %s291, %s292
      %s294 = smul.addr %s293, 8
      %s295 = scalar_lea.vmem %s5, %s294
      %v296 = vld [vmem:[%s277] sm:$0xff]
      %v297 = vld [vmem:[%s277 + $0x8] sm:$0xff]
      %v298 = vld [vmem:[%s277 + $0x10] sm:$0xff]
      %v299 = vld [vmem:[%s277 + $0x18] sm:$0xff]
      %v300 = vld [vmem:[%s287] sm:$0xff]
      %v301 = vld [vmem:[%s287 + $0x8] sm:$0xff]
      %v302 = vld [vmem:[%s287 + $0x10] sm:$0xff]
      %v303 = vld [vmem:[%s287 + $0x18] sm:$0xff]
      %305 = vset.pattern.permute.xlu0 0
      %306 = vperm.xlu0 %305, %v300
      %v307 = vpop.permute.xlu0 %306
      %310 = vset.pattern.permute.xlu0 0
      %311 = vperm.xlu0 %310, %v301
      %v312 = vpop.permute.xlu0 %311
      %315 = vset.pattern.permute.xlu0 0
      %316 = vperm.xlu0 %315, %v302
      %v317 = vpop.permute.xlu0 %316
      %320 = vset.pattern.permute.xlu0 0
      %321 = vperm.xlu0 %320, %v303
      %v322 = vpop.permute.xlu0 %321
      %v324 = vsub.f32 %v296, %v307
      %v325 = vsub.f32 %v297, %v312
      %v326 = vsub.f32 %v298, %v317
      %v327 = vsub.f32 %v299, %v322
      %v328 = vld [vmem:[%s282] sm:$0xff]
      %v329 = vld [vmem:[%s282 + $0x8] sm:$0xff]
      %v330 = vld [vmem:[%s282 + $0x10] sm:$0xff]
      %v331 = vld [vmem:[%s282 + $0x18] sm:$0xff]
      %333 = vset.pattern.permute.xlu0 0
      %334 = vperm.xlu0 %333, %v328
      %v335 = vpop.permute.xlu0 %334
      %338 = vset.pattern.permute.xlu0 0
      %339 = vperm.xlu0 %338, %v329
      %v340 = vpop.permute.xlu0 %339
      %343 = vset.pattern.permute.xlu0 0
      %344 = vperm.xlu0 %343, %v330
      %v345 = vpop.permute.xlu0 %344
      %348 = vset.pattern.permute.xlu0 0
      %349 = vperm.xlu0 %348, %v331
      %v350 = vpop.permute.xlu0 %349
      %v352 = vmul.f32 %v324, %v335
      %v353 = vmul.f32 %v325, %v340
      %v354 = vmul.f32 %v326, %v345
      %v355 = vmul.f32 %v327, %v350
      %v356 = vld [vmem:[%s1] sm:$0xff]
      %v357 = vld [vmem:[%s1 + $0x8] sm:$0xff]
      %v358 = vld [vmem:[%s1 + $0x10] sm:$0xff]
      %v359 = vld [vmem:[%s1 + $0x18] sm:$0xff]
      %v360 = vld [vmem:[%s1 + $0x20] sm:$0xff]
      %v361 = vld [vmem:[%s1 + $0x28] sm:$0xff]
      %v362 = vld [vmem:[%s1 + $0x30] sm:$0xff]
      %v363 = vld [vmem:[%s1 + $0x38] sm:$0xff]
      %v364 = vld [vmem:[%s1 + $0x40] sm:$0xff]
      %v365 = vld [vmem:[%s1 + $0x48] sm:$0xff]
      %v366 = vld [vmem:[%s1 + $0x50] sm:$0xff]
      %v367 = vld [vmem:[%s1 + $0x58] sm:$0xff]
      %v368 = vld [vmem:[%s1 + $0x60] sm:$0xff]
      %v369 = vld [vmem:[%s1 + $0x68] sm:$0xff]
      %v370 = vld [vmem:[%s1 + $0x70] sm:$0xff]
      %v371 = vld [vmem:[%s1 + $0x78] sm:$0xff]
      %v372 = vld [vmem:[%s4] sm:$0xff]
      %v373 = vld [vmem:[%s4 + $0x8] sm:$0xff]
      %v374 = vld [vmem:[%s4 + $0x10] sm:$0xff]
      %v375 = vld [vmem:[%s4 + $0x18] sm:$0xff]
      %v376 = vld [vmem:[%s4 + $0x20] sm:$0xff]
      %v377 = vld [vmem:[%s4 + $0x28] sm:$0xff]
      %v378 = vld [vmem:[%s4 + $0x30] sm:$0xff]
      %v379 = vld [vmem:[%s4 + $0x38] sm:$0xff]
      %v380 = vld [vmem:[%s4 + $0x40] sm:$0xff]
      %v381 = vld [vmem:[%s4 + $0x48] sm:$0xff]
      %v382 = vld [vmem:[%s4 + $0x50] sm:$0xff]
      %v383 = vld [vmem:[%s4 + $0x58] sm:$0xff]
      %v384 = vld [vmem:[%s4 + $0x60] sm:$0xff]
      %v385 = vld [vmem:[%s4 + $0x68] sm:$0xff]
      %v386 = vld [vmem:[%s4 + $0x70] sm:$0xff]
      %v387 = vld [vmem:[%s4 + $0x78] sm:$0xff]
      %389 = vset.pattern.permute.xlu0 0
      %390 = vperm.xlu0 %389, %v372
      %v391 = vpop.permute.xlu0 %390
      %394 = vset.pattern.permute.xlu0 0
      %395 = vperm.xlu0 %394, %v373
      %v396 = vpop.permute.xlu0 %395
      %399 = vset.pattern.permute.xlu0 0
      %400 = vperm.xlu0 %399, %v374
      %v401 = vpop.permute.xlu0 %400
      %404 = vset.pattern.permute.xlu0 0
      %405 = vperm.xlu0 %404, %v375
      %v406 = vpop.permute.xlu0 %405
      %409 = vset.pattern.permute.xlu0 0
      %410 = vperm.xlu0 %409, %v376
      %v411 = vpop.permute.xlu0 %410
      %414 = vset.pattern.permute.xlu0 0
      %415 = vperm.xlu0 %414, %v377
      %v416 = vpop.permute.xlu0 %415
      %419 = vset.pattern.permute.xlu0 0
      %420 = vperm.xlu0 %419, %v378
      %v421 = vpop.permute.xlu0 %420
      %424 = vset.pattern.permute.xlu0 0
      %425 = vperm.xlu0 %424, %v379
      %v426 = vpop.permute.xlu0 %425
      %429 = vset.pattern.permute.xlu0 0
      %430 = vperm.xlu0 %429, %v380
      %v431 = vpop.permute.xlu0 %430
      %434 = vset.pattern.permute.xlu0 0
      %435 = vperm.xlu0 %434, %v381
      %v436 = vpop.permute.xlu0 %435
      %439 = vset.pattern.permute.xlu0 0
      %440 = vperm.xlu0 %439, %v382
      %v441 = vpop.permute.xlu0 %440
      %444 = vset.pattern.permute.xlu0 0
      %445 = vperm.xlu0 %444, %v383
      %v446 = vpop.permute.xlu0 %445
      %449 = vset.pattern.permute.xlu0 0
      %450 = vperm.xlu0 %449, %v384
      %v451 = vpop.permute.xlu0 %450
      %454 = vset.pattern.permute.xlu0 0
      %455 = vperm.xlu0 %454, %v385
      %v456 = vpop.permute.xlu0 %455
      %459 = vset.pattern.permute.xlu0 0
      %460 = vperm.xlu0 %459, %v386
      %v461 = vpop.permute.xlu0 %460
      %464 = vset.pattern.permute.xlu0 0
      %465 = vperm.xlu0 %464, %v387
      %v466 = vpop.permute.xlu0 %465
      %vm468 = vcmask 261120
      %v470 = vsel %vm468, %v356, 0
      %v473 = vsel %vm468, %v357, 0
      %v476 = vsel %vm468, %v358, 0
      %v479 = vsel %vm468, %v359, 0
      %v482 = vsel %vm468, %v360, 0
      %v485 = vsel %vm468, %v361, 0
      %v488 = vsel %vm468, %v362, 0
      %v491 = vsel %vm468, %v363, 0
      %v494 = vsel %vm468, %v364, 0
      %v497 = vsel %vm468, %v365, 0
      %v500 = vsel %vm468, %v366, 0
      %v503 = vsel %vm468, %v367, 0
      %v506 = vsel %vm468, %v368, 0
      %v509 = vsel %vm468, %v369, 0
      %v512 = vsel %vm468, %v370, 0
      %v515 = vsel %vm468, %v371, 0
      %517 = vmatprep.subr.mxu0 0.0
      %518 = vmatpush1.msra.mxu0 %v352
      %519 = vmatprep.subr.mxu0 0.0
      %520 = vmatpush1.msra.mxu0 %v353
      %521 = vmatprep.subr.mxu0 0.0
      %522 = vmatpush1.msra.mxu0 %v354
      %523 = vmatprep.subr.mxu0 0.0
      %524 = vmatpush1.msra.mxu0 %v355
      %525 = vmatprep.subr.mxu0 0.0
      %526 = vmatpush1.msra.mxu0 0.0
      %527 = vmatprep.subr.mxu0 0.0
      %528 = vmatpush1.msra.mxu0 0.0
      %529 = vmatprep.subr.mxu0 0.0
      %530 = vmatpush1.msra.mxu0 0.0
      %531 = vmatprep.subr.mxu0 0.0
      %532 = vmatpush1.msra.mxu0 0.0
      %533 = vmatprep.subr.mxu0 0.0
      %534 = vmatpush1.msra.mxu0 0.0
      %535 = vmatprep.subr.mxu0 0.0
      %536 = vmatpush1.msra.mxu0 0.0
      %537 = vmatprep.subr.mxu0 0.0
      %538 = vmatpush1.msra.mxu0 0.0
      %539 = vmatprep.subr.mxu0 0.0
      %540 = vmatpush1.msra.mxu0 0.0
      %541 = vmatprep.subr.mxu0 0.0
      %542 = vmatpush1.msra.mxu0 0.0
      %543 = vmatprep.subr.mxu0 0.0
      %544 = vmatpush1.msra.mxu0 0.0
      %545 = vmatprep.subr.mxu0 0.0
      %546 = vmatpush1.msra.mxu0 0.0
      %547 = vmatprep.subr.mxu0 0.0
      %548 = vmatpush1.msra.mxu0 0.0
      %549 = vmatprep.subr.mxu0 0.0
      %550 = vmatpush1.msra.mxu0 0.0
      %551 = vmatprep.subr.mxu0 0.0
      %552 = vmatpush1.msra.mxu0 0.0
      %553 = vmatprep.subr.mxu0 0.0
      %554 = vmatpush1.msra.mxu0 0.0
      %555 = vmatprep.subr.mxu0 0.0
      %556 = vmatpush1.msra.mxu0 0.0
      %557 = vmatprep.subr.mxu0 0.0
      %558 = vmatpush1.msra.mxu0 0.0
      %559 = vmatprep.subr.mxu0 0.0
      %560 = vmatpush1.msra.mxu0 0.0
      %561 = vmatprep.subr.mxu0 0.0
      %562 = vmatpush1.msra.mxu0 0.0
      %563 = vmatprep.subr.mxu0 0.0
      %564 = vmatpush1.msra.mxu0 0.0
      %565 = vmatprep.subr.mxu0 0.0
      %566 = vmatpush1.msra.mxu0 0.0
      %567 = vmatprep.subr.mxu0 0.0
      %568 = vmatpush1.msra.mxu0 0.0
      %569 = vmatprep.subr.mxu0 0.0
      %570 = vmatpush1.msra.mxu0 0.0
      %571 = vmatprep.subr.mxu0 0.0
      %572 = vmatpush1.msra.mxu0 0.0
      %573 = vmatprep.subr.mxu0 0.0
      %574 = vmatpush1.msra.mxu0 0.0
      %575 = vmatprep.subr.mxu0 0.0
      %576 = vmatpush1.msra.mxu0 0.0
      %577 = vmatprep.subr.mxu0 0.0
      %578 = vmatpush1.msra.mxu0 0.0
      %579 = vmatprep.subr.mxu0 0.0
      %580 = vmatpush1.msra.mxu0 0.0
      %581 = vmatprep.mubr.f32.mxu0 0.0
      %582 = vmatmul.mubr.f32.gmra.mrb[0].mxu0 %v470
      %v583 = vpop.f32.mrb[0].mxu0
      %v584 = vadd.f32 %v391, %v583
      %v585 = vpop.f32.mrb[0].mxu0
      %586 = vmatprep.mubr.f32.mxu0 0.0
      %587 = vmatmul.mubr.f32.gmra.mrb[0].mxu0 %v473
      %v588 = vpop.f32.mrb[0].mxu0
      %v589 = vadd.f32 %v396, %v588
      %v590 = vpop.f32.mrb[0].mxu0
      %591 = vmatprep.mubr.f32.mxu0 0.0
      %592 = vmatmul.mubr.f32.gmra.mrb[0].mxu0 %v476
      %v593 = vpop.f32.mrb[0].mxu0
      %v594 = vadd.f32 %v401, %v593
      %v595 = vpop.f32.mrb[0].mxu0
      %596 = vmatprep.mubr.f32.mxu0 0.0
      %597 = vmatmul.mubr.f32.gmra.mrb[0].mxu0 %v479
      %v598 = vpop.f32.mrb[0].mxu0
      %v599 = vadd.f32 %v406, %v598
      %v600 = vpop.f32.mrb[0].mxu0
      %601 = vmatprep.mubr.f32.mxu0 0.0
      %602 = vmatmul.mubr.f32.gmra.mrb[0].mxu0 %v482
      %v603 = vpop.f32.mrb[0].mxu0
      %v604 = vadd.f32 %v411, %v603
      %v605 = vpop.f32.mrb[0].mxu0
      %606 = vmatprep.mubr.f32.mxu0 0.0
      %607 = vmatmul.mubr.f32.gmra.mrb[0].mxu0 %v485
      %v608 = vpop.f32.mrb[0].mxu0
      %v609 = vadd.f32 %v416, %v608
      %v610 = vpop.f32.mrb[0].mxu0
      %611 = vmatprep.mubr.f32.mxu0 0.0
      %612 = vmatmul.mubr.f32.gmra.mrb[0].mxu0 %v488
      %v613 = vpop.f32.mrb[0].mxu0
      %v614 = vadd.f32 %v421, %v613
      %v615 = vpop.f32.mrb[0].mxu0
      %616 = vmatprep.mubr.f32.mxu0 0.0
      %617 = vmatmul.mubr.f32.gmra.mrb[0].mxu0 %v491
      %v618 = vpop.f32.mrb[0].mxu0
      %v619 = vadd.f32 %v426, %v618
      %v620 = vpop.f32.mrb[0].mxu0
      %621 = vmatprep.mubr.f32.mxu0 0.0
      %622 = vmatmul.mubr.f32.gmra.mrb[0].mxu0 %v494
      %v623 = vpop.f32.mrb[0].mxu0
      %v624 = vadd.f32 %v431, %v623
      %v625 = vpop.f32.mrb[0].mxu0
      %626 = vmatprep.mubr.f32.mxu0 0.0
      %627 = vmatmul.mubr.f32.gmra.mrb[0].mxu0 %v497
      %v628 = vpop.f32.mrb[0].mxu0
      %v629 = vadd.f32 %v436, %v628
      %v630 = vpop.f32.mrb[0].mxu0
      %631 = vmatprep.mubr.f32.mxu0 0.0
      %632 = vmatmul.mubr.f32.gmra.mrb[0].mxu0 %v500
      %v633 = vpop.f32.mrb[0].mxu0
      %v634 = vadd.f32 %v441, %v633
      %v635 = vpop.f32.mrb[0].mxu0
      %636 = vmatprep.mubr.f32.mxu0 0.0
      %637 = vmatmul.mubr.f32.gmra.mrb[0].mxu0 %v503
      %v638 = vpop.f32.mrb[0].mxu0
      %v639 = vadd.f32 %v446, %v638
      %v640 = vpop.f32.mrb[0].mxu0
      %641 = vmatprep.mubr.f32.mxu0 0.0
      %642 = vmatmul.mubr.f32.gmra.mrb[0].mxu0 %v506
      %v643 = vpop.f32.mrb[0].mxu0
      %v644 = vadd.f32 %v451, %v643
      %v645 = vpop.f32.mrb[0].mxu0
      %646 = vmatprep.mubr.f32.mxu0 0.0
      %647 = vmatmul.mubr.f32.gmra.mrb[0].mxu0 %v509
      %v648 = vpop.f32.mrb[0].mxu0
      %v649 = vadd.f32 %v456, %v648
      %v650 = vpop.f32.mrb[0].mxu0
      %651 = vmatprep.mubr.f32.mxu0 0.0
      %652 = vmatmul.mubr.f32.gmra.mrb[0].mxu0 %v512
      %v653 = vpop.f32.mrb[0].mxu0
      %v654 = vadd.f32 %v461, %v653
      %v655 = vpop.f32.mrb[0].mxu0
      %656 = vmatprep.mubr.f32.mxu0 0.0
      %657 = vmatmul.mubr.f32.gmra.mrb[0].mxu0 %v515
      %v658 = vpop.f32.mrb[0].mxu0
      %v659 = vadd.f32 %v466, %v658
      %v660 = vpop.f32.mrb[0].mxu0
      %661 = vdwg.mxu0
      %662 = vst [vmem:[%s295] sm:$0xff] %v584
      %663 = vst [vmem:[%s295 + $0x8] sm:$0xff] %v589
      %664 = vst [vmem:[%s295 + $0x10] sm:$0xff] %v594
      %665 = vst [vmem:[%s295 + $0x18] sm:$0xff] %v599
      %666 = vst [vmem:[%s295 + $0x20] sm:$0xff] %v604
      %667 = vst [vmem:[%s295 + $0x28] sm:$0xff] %v609
      %668 = vst [vmem:[%s295 + $0x30] sm:$0xff] %v614
      %669 = vst [vmem:[%s295 + $0x38] sm:$0xff] %v619
      %670 = vst [vmem:[%s295 + $0x40] sm:$0xff] %v624
      %671 = vst [vmem:[%s295 + $0x48] sm:$0xff] %v629
      %672 = vst [vmem:[%s295 + $0x50] sm:$0xff] %v634
      %673 = vst [vmem:[%s295 + $0x58] sm:$0xff] %v639
      %674 = vst [vmem:[%s295 + $0x60] sm:$0xff] %v644
      %675 = vst [vmem:[%s295 + $0x68] sm:$0xff] %v649
      %676 = vst [vmem:[%s295 + $0x70] sm:$0xff] %v654
      %677 = vst [vmem:[%s295 + $0x78] sm:$0xff] %v659
      %p678 = scmp.lt.s32.totalorder %s20, 1
      %s679 = scalar_select %p678, %s20, 1
      %p680 = scmp.lt.s32.totalorder %s21, 0
      %s681 = scalar_select %p680, %s21, 0
      %s682 = smul.addr %s679, 16
      %s683 = sadd.s32 %s681, %s682
      %s684 = smul.addr %s683, 8
      %s685 = scalar_lea.vmem %s5, %s684
      // Predicated region
      $region41: #{downsample_forward.3} parent=39 // pred_check
        %p686 = pneg %p170
      $region42: #{downsample_forward.3} parent=39 // pred_check_branch
        %688 = sbr.rel (%p686) target = $region44
      $region43: #{downsample_forward.3} parent=39 // pred_region
        _
      $region44: #{downsample_forward.3} parent=39 // pred_fallthru
        _
    $region40: #{downsample_forward.3} parent=5 // pred_fallthru
      _
    %p689 = scmp.le.s32.totalorder 2, %s11
    // Predicated region
    $region45: #{downsample_forward.3} parent=5 // pred_check
      %p690 = pneg %p689
    $region46: #{downsample_forward.3} parent=5 // pred_check_branch
      %692 = sbr.rel (%p690) target = $region48
    $region47: #{downsample_forward.3} parent=5 // pred_region
      %s693 = ssub.s32 %s11, 2
      // Predicated region
      $region49: #{downsample_forward.3} parent=47 // pred_check
        %p694 = pneg %p176
      $region50: #{downsample_forward.3} parent=47 // pred_check_branch
        %696 = sbr.rel (%p694) target = $region52
      $region51: #{downsample_forward.3} parent=47 // pred_region
        %p697 = scmp.lt.s32.totalorder %s22, 1
        %s698 = scalar_select %p697, %s22, 1
        %p699 = scmp.lt.s32.totalorder %s23, 0
        %s700 = scalar_select %p699, %s23, 0
        %s701 = smul.addr %s698, 16
        %s702 = sadd.s32 %s700, %s701
        %s703 = smul.addr %s702, 8
        %s704 = scalar_lea.vmem %s5, %s703
      $region52: #{downsample_forward.3} parent=47 // pred_fallthru
        _
    $region48: #{downsample_forward.3} parent=5 // pred_fallthru
      _
  $region6: #{downsample_forward.3} parent=0 // loop_footer
    %s15 = sadd.s32 1, %s11
  $region7: #{downsample_forward.3} parent=0 // loop_footer_branch
    %10 = sbr.rel target = $region3
  $region8: #{downsample_forward.3} parent=0 // loop_exit
    _

</llo_original>
